<compile_context>
chip_gen: v6e
topology: v6e:2x2x1
jax: 0.10.0
libtpu: 0.0.40
codegen_flags: <defaults>
</compile_context>

<pallas_src>
import jax
import jax.numpy as jnp
from jax.experimental import pallas as pl
from jax.experimental.pallas import tpu as pltpu


_SMALL_BYTES = 256 * 1024  # below this, a plain copy beats a kernel launch


def _copy_kernel(x_ref, o_ref):
    # Pure data movement: HBM tile -> VMEM (auto-DMA via BlockSpec) -> HBM.
    o_ref[...] = x_ref[...]


def _round_up(a: int, m: int) -> int:
    return -(-a // m) * m


def _pick_block_bytes() -> int:
    """Per-generation target block size for the copy pipeline."""
    try:
        kind = jax.devices()[0].device_kind.lower()
    except Exception:  # pragma: no cover - defensive
        kind = ""
    if ("v6" in kind) or ("v7" in kind):
        # 4 MiB blocks: double-buffered (in+out) footprint = 16 MiB, inside the
        # 32 MiB scoped-VMEM default on v6e and v7x; amortizes the ~0.35 us
        # per-grid-step overhead at 1.4-3.2 TB/s HBM.
        return 4 * 1024 * 1024
    # v5e (and unknown/CPU-interpret): 2 MiB blocks -> 8 MiB footprint, inside
    # the 16 MiB scoped-VMEM default.  Bigger buys nothing at 0.82 TB/s.
    return 2 * 1024 * 1024


def _pallas_copy_2d(slab: jax.Array) -> jax.Array:
    """Tiled, lane-dense HBM->HBM copy of a (rows, lane) slab. lane % 128 == 0."""
    rows, lane = slab.shape
    dtype = slab.dtype
    itemsize = jnp.dtype(dtype).itemsize

    # dtype-packed sublane multiple: 8 for 4-byte, 16 for 2-byte, 32 for 1-byte.
    sub = 8 * max(1, 4 // itemsize)
    rows_rounded = _round_up(rows, sub)

    block_bytes = _pick_block_bytes()
    tile_r = (block_bytes // (lane * itemsize)) // sub * sub
    tile_r = max(sub, min(tile_r, rows_rounded))

    num_blocks = pl.cdiv(rows, tile_r)
    if num_blocks > 1:
        # Balance blocks so the last one is not a tiny tail (helps v7x's
        # 2 TensorCores under dimension_semantics=("parallel",)).  Never grows
        # past the VMEM-bounded tile_r computed above.
        tile_r = max(sub, min(_round_up(pl.cdiv(rows, num_blocks), sub), rows_rounded))
        num_blocks = pl.cdiv(rows, tile_r)

    return pl.pallas_call(
        _copy_kernel,
        out_shape=jax.ShapeDtypeStruct((rows, lane), dtype),
        grid=(num_blocks,),
        in_specs=[pl.BlockSpec((tile_r, lane), lambda i: (i, 0))],
        out_specs=pl.BlockSpec((tile_r, lane), lambda i: (i, 0)),
        compiler_params=pltpu.CompilerParams(
            dimension_semantics=("parallel",),
        ),
    )(slab)


def pallas_device_copy(x, *, copy: bool = False, force_kernel: bool = False) -> jax.Array:
    """Equivalent of `input.sdaa(non_blocking=True)`.

    Default (copy=False, force_kernel=False): fast path — the array is already
    device-resident under JAX, so the move is a no-op and `x` is returned.

    copy=True: a distinct fresh buffer is required; tiny tensors use a plain
    jnp copy, larger ones use the tiled Pallas copy kernel.

    force_kernel=True: always route through the Pallas kernel (validation).
    """
    x = jnp.asarray(x)
    orig_shape = x.shape
    dtype = x.dtype
    total = x.size
    if total == 0:
        return x

    if not (copy or force_kernel):
        # Fast path: the .sdaa() move is a semantic no-op in JAX.
        return x

    nbytes = total * jnp.dtype(dtype).itemsize
    if nbytes < _SMALL_BYTES and not force_kernel:
        # Launch + per-step overhead would dominate; plain copy is faster.
        return jnp.copy(x)

    # --- pick the widest lane-dense last dim (multiple of 128) ---------------
    lane = None
    for cand in (1024, 512, 256, 128):
        if total % cand == 0:
            lane = cand
            break

    if lane is not None:
        # Common case: flatten/reshape are metadata-only; the kernel is the
        # only HBM round trip.
        out = _pallas_copy_2d(x.reshape(total // lane, lane))
        return out.reshape(orig_shape)

    # --- non-128-divisible fallback -------------------------------------------
    # Run the kernel on the 128-aligned bulk only; handle the small tail with a
    # single concatenate (one pass) instead of zero-pad + scatter + slice.
    lane = 128
    bulk_elems = (total // lane) * lane
    flat = x.reshape(-1)
    if bulk_elems == 0:
        return jnp.copy(x)  # tiny (<128 elements): nothing worth a kernel
    bulk_out = _pallas_copy_2d(flat[:bulk_elems].reshape(bulk_elems // lane, lane))
    tail = flat[bulk_elems:]
    return jnp.concatenate([bulk_out.reshape(-1), tail]).reshape(orig_shape)


class SingleGPU:
    """JAX/Pallas port of the PyTorch SingleGPU wrapper.

    forward(x) = module(device_copy(x))

    By default the device move is the zero-cost fast path (JAX arrays are
    already on the accelerator).  Set force_copy_kernel=True to materialize a
    fresh buffer through the Pallas copy kernel.
    """

    def __init__(self, module, force_copy_kernel: bool = False):
        # `module` is user-supplied in PyTorch; any callable works here.
        self.module = module
        self.force_copy_kernel = force_copy_kernel

    def __call__(self, x):
        return self.module(
            pallas_device_copy(x, copy=self.force_copy_kernel,
                               force_kernel=self.force_copy_kernel)
        )


if __name__ == "__main__":
    key = jax.random.PRNGKey(0)
    # NCHW input, consistent with the segmentation-model context.
    x = jax.random.normal(key, (2, 4, 16, 16), dtype=jnp.float32)

    # 1) Default wrapper: device move is the no-op fast path.
    model_fast = SingleGPU(module=lambda t: t)
    y_fast = jax.block_until_ready(model_fast(x))
    assert y_fast.shape == x.shape and y_fast.dtype == x.dtype
    assert bool(jnp.array_equal(y_fast, x)), "fast-path mismatch"

    # 2) Kernel path exercised once through the wrapper.
    model_kernel = SingleGPU(module=lambda t: t, force_copy_kernel=True)
    y = jax.block_until_ready(model_kernel(x))
    assert y.shape == x.shape and y.dtype == x.dtype
    assert bool(jnp.allclose(y, x)), "device-copy kernel mismatch"

    # 3) Non-128-divisible element count exercises the bulk + tail fallback.
    x2 = jax.random.normal(jax.random.PRNGKey(0), (3, 5, 9, 7), dtype=jnp.float32)
    y2 = jax.block_until_ready(pallas_device_copy(x2, force_kernel=True))
    assert y2.shape == x2.shape and bool(jnp.allclose(y2, x2)), "fallback mismatch"

    # 4) bf16 exercises the packed-sublane (16,128) tiling path.
    x3 = jax.random.normal(jax.random.PRNGKey(0), (2, 4, 32, 32)).astype(jnp.bfloat16)
    y3 = jax.block_until_ready(pallas_device_copy(x3, force_kernel=True))
    assert y3.shape == x3.shape and y3.dtype == x3.dtype
    assert bool(jnp.array_equal(y3, x3)), "bf16 copy mismatch"

    print("KERNEL_OK")
</pallas_src>

<mosaic_0001>
module attributes {stable_mosaic.version = 11 : i64} {
  func.func @_copy_kernel(%arg0: i32, %arg1: memref<8x1024xf32, #tpu.memory_space<vmem>>, %arg2: memref<8x1024xf32, #tpu.memory_space<vmem>>) attributes {dimension_semantics = [#tpu.dimension_semantics<parallel>], iteration_bounds = array<i64: 1>, scalar_prefetch = 0 : i64, scratch_operands = 0 : i64, tpu.core_type = #tpu.core_type<tc>, window_params = [{transform_indices = @transform_0, window_bounds = array<i64: 8, 1024>}, {transform_indices = @transform_1, window_bounds = array<i64: 8, 1024>}]} {
    %c0 = arith.constant 0 : index
    %c0_0 = arith.constant 0 : index
    %0 = vector.load %arg1[%c0, %c0_0] : memref<8x1024xf32, #tpu.memory_space<vmem>>, vector<8x1024xf32>
    %c0_1 = arith.constant 0 : index
    %c0_2 = arith.constant 0 : index
    %1 = vector.load %arg2[%c0_1, %c0_2] : memref<8x1024xf32, #tpu.memory_space<vmem>>, vector<8x1024xf32>
    tpu.vector_store %arg2[%c0_1, %c0_2], %0 {strides = array<i32>} : memref<8x1024xf32, #tpu.memory_space<vmem>>, vector<8x1024xf32>,
    return
  }
  func.func @transform_0(%arg0: i32) -> (i32, i32) {
    %c0_i32 = arith.constant 0 : i32
    %c0_i32_0 = arith.constant 0 : i32
    return %arg0, %c0_i32 : i32, i32
  }
  func.func @transform_1(%arg0: i32) -> (i32, i32) {
    %c0_i32 = arith.constant 0 : i32
    %c0_i32_0 = arith.constant 0 : i32
    return %arg0, %c0_i32 : i32, i32
  }
}

</mosaic_0001>

<llo_original>
// kernel: tpu_custom_call.1
$region0: #{tpu_custom_call.1}
  #allocation0 [shape = 'u32[]', space=smem, size = 0x4, offset = 0x4, fixed_abs, tag = 'smem constant byte address 0x4 - core index']
  #allocation1 [shape = 'u32[144,128]{1,0:T(1,128)}', space=vmem, size = 0x12000, scoped, tag = 'internal scratch']
  %s0 = inlined_call_operand.hbm [shape: f32[2,1024], index: 0, kind: input, shape index: {}]
  %s1 = inlined_call_operand.hbm [shape: f32[2,1024], index: 1, kind: output, shape index: {}]
  %s2 = sld [smem:[#allocation0]]
  $region18: #{tpu_custom_call.1} parent=0
    _
  %s4 = ssub.s32 1, %s2
  %s5 = scalar_select 0, %s4, %s2
  $region1: #{tpu_custom_call.1} parent=0
    #allocation2 [shape = 'u8[32768]{0}', space=vmem, size = 0x8000, scoped, tag = 'input window, operand 0, single buffered']
    #allocation3 [shape = 's32[1]{0}', space=sflag, size = 0x4, scoped, tag = 'scoped memory for tpu_custom_call.1']
    #allocation4 [shape = 's32[1]{0}', space=sflag, size = 0x4, scoped, tag = 'scoped memory for tpu_custom_call.1']
    #allocation5 [shape = 'u8[32768]{0}', space=vmem, size = 0x8000, scoped, tag = 'output window, operand 0, single buffered']
    %6 = vsyncpa [#allocation3], 0
    %7 = vsyncpa [#allocation4], 0
    // Predicated region
    $region2: #{tpu_custom_call.1} parent=1 // pred_check
      _
    $region3: #{tpu_custom_call.1} parent=1 // pred_check_branch
      %9 = sbr.rel (0) target = $region5
    $region4: #{tpu_custom_call.1} parent=1 // pred_region
      %s11 = ssub.s32 1024, 256
      %12 = vsyncadd [#allocation3], %s11
      %s13 = sshll.u32 [#allocation2], 4
      %s14 = int_to_ptr.vmem [resolvable:$true] %s13
      %19 = dma.hbm_to_vmem [thread:$0]  %s0, 256, %s14, [#allocation3], 256, 256, 16
    $region5: #{tpu_custom_call.1} parent=1 // pred_fallthru
      _
    // Predicated region
    $region6: #{tpu_custom_call.1} parent=1 // pred_check
      _
    $region7: #{tpu_custom_call.1} parent=1 // pred_check_branch
      %21 = sbr.rel (0) target = $region9
    $region8: #{tpu_custom_call.1} parent=1 // pred_region
      %22 = dma.done [#allocation3], 1024
    $region9: #{tpu_custom_call.1} parent=1 // pred_fallthru
      _
    %v23 = vld [vmem:[#allocation2] sm:$0xff]
    %v24 = vld [vmem:[#allocation2 + $0x8] sm:$0xff]
    %v25 = vld [vmem:[#allocation2 + $0x10] sm:$0xff]
    %v26 = vld [vmem:[#allocation2 + $0x18] sm:$0xff]
    %v27 = vld [vmem:[#allocation2 + $0x20] sm:$0xff]
    %v28 = vld [vmem:[#allocation2 + $0x28] sm:$0xff]
    %v29 = vld [vmem:[#allocation2 + $0x30] sm:$0xff]
    %v30 = vld [vmem:[#allocation2 + $0x38] sm:$0xff]
    %31 = vst [vmem:[#allocation5] sm:$0xff] %v23
    %32 = vst [vmem:[#allocation5 + $0x8] sm:$0xff] %v24
    %33 = vst [vmem:[#allocation5 + $0x10] sm:$0xff] %v25
    %34 = vst [vmem:[#allocation5 + $0x18] sm:$0xff] %v26
    %35 = vst [vmem:[#allocation5 + $0x20] sm:$0xff] %v27
    %36 = vst [vmem:[#allocation5 + $0x28] sm:$0xff] %v28
    %37 = vst [vmem:[#allocation5 + $0x30] sm:$0xff] %v29
    %38 = vst [vmem:[#allocation5 + $0x38] sm:$0xff] %v30
    // Predicated region
    $region10: #{tpu_custom_call.1} parent=1 // pred_check
      _
    $region11: #{tpu_custom_call.1} parent=1 // pred_check_branch
      %40 = sbr.rel (0) target = $region13
    $region12: #{tpu_custom_call.1} parent=1 // pred_region
      %s42 = ssub.s32 1024, 256
      %43 = vsyncadd [#allocation4], %s42
      %s44 = sshll.u32 [#allocation5], 4
      %s45 = int_to_ptr.vmem [resolvable:$true] %s44
      %50 = dma.vmem_to_hbm [thread:$0]  %s45, 256, %s1, [#allocation4], 256, 256, 16
    $region13: #{tpu_custom_call.1} parent=1 // pred_fallthru
      _
    // Predicated region
    $region14: #{tpu_custom_call.1} parent=1 // pred_check
      _
    $region15: #{tpu_custom_call.1} parent=1 // pred_check_branch
      %52 = sbr.rel (0) target = $region17
    $region16: #{tpu_custom_call.1} parent=1 // pred_region
      %53 = dma.done [#allocation4], 1024
    $region17: #{tpu_custom_call.1} parent=1 // pred_fallthru
      _
    %54 = vsyncpa [#allocation3], 1
    %55 = vsyncpa [#allocation4], 1

</llo_original>
